<compile_context>
chip_gen: v6e
topology: v6e:2x2x1
jax: 0.10.0
libtpu: 0.0.40
codegen_flags: <defaults>
</compile_context>

<pallas_src>
import jax
import jax.numpy as jnp
from jax.experimental import pallas as pl
from jax.experimental.pallas import tpu as pltpu


def _round_up(n, m):
    return ((n + m - 1) // m) * m


def dqn_kernel(x_ref,
               w1_ref, b1_ref,
               w2_ref, b2_ref,
               w3_ref, b3_ref,
               w4_ref, b4_ref,
               o_ref):
    """One batch tile: 4x (matmul + bias [+ ReLU]).  BN already folded into W/b."""
    cdt = w2_ref.dtype  # hidden-layer matmul dtype (f32 or bf16); accum stays f32

    # fc1 (+ folded bn1) in full f32 (raw observations keep precision) -> relu.
    x = x_ref[...]
    h = jnp.dot(x, w1_ref[...], preferred_element_type=jnp.float32) + b1_ref[...]
    h = jnp.maximum(h, 0.0).astype(cdt)          # dropout (eval) == identity

    # fc2 (+ folded bn2) -> relu
    h = jnp.dot(h, w2_ref[...], preferred_element_type=jnp.float32) + b2_ref[...]
    h = jnp.maximum(h, 0.0).astype(cdt)

    # fc3 -> relu                                 (dropout (eval) == identity)
    h = jnp.dot(h, w3_ref[...], preferred_element_type=jnp.float32) + b3_ref[...]
    h = jnp.maximum(h, 0.0).astype(cdt)

    # fc4 at its true (narrow) output width; accumulation + bias in f32.
    o_ref[...] = (jnp.dot(h, w4_ref[...], preferred_element_type=jnp.float32)
                  + b4_ref[...]).astype(o_ref.dtype)


def prepare_params(params, compute_dtype=jnp.bfloat16):
    """One-time weight prep (hoisted out of the per-call forward pass):
    fold eval-mode BatchNorm into fc1/fc2 and cast the hidden-layer weights to
    the matmul input dtype.  fc1 weights/bias and all biases stay f32."""
    w1 = (params["w1"] * params["s1"]).astype(jnp.float32)
    b1 = (params["b1"] * params["s1"] + params["t1"]).astype(jnp.float32)
    w2 = (params["w2"] * params["s2"]).astype(compute_dtype)
    b2 = (params["b2"] * params["s2"] + params["t2"]).astype(jnp.float32)
    return dict(
        w1=w1, b1=b1,
        w2=w2, b2=b2,
        w3=params["w3"].astype(compute_dtype), b3=params["b3"].astype(jnp.float32),
        w4=params["w4"].astype(compute_dtype), b4=params["b4"].astype(jnp.float32),
    )


def _resident(arr):
    """Full-array block with a constant index -> stays VMEM-resident.  A single
    buffer suffices since the block never changes across the grid."""
    idx = lambda i: (0, 0)
    try:
        return pl.BlockSpec(arr.shape, idx, pipeline_mode=pl.Buffered(1))
    except (TypeError, ValueError):  # pipeline_mode / Buffered(1) unsupported
        return pl.BlockSpec(arr.shape, idx)


def dqn_forward(x, prepared, *, block_b=2048):
    """x: (B, input_dim) f32.  prepared: output of prepare_params()."""
    B, in_dim = x.shape
    out_dim = prepared["w4"].shape[1]

    # Batch tile: large enough to amortize per-grid-step overhead, never larger
    # than the batch, and split so the 1-D parallel grid has >= 2 steps when the
    # batch allows it (dual-TensorCore sharding on v7x).
    TB = _round_up(min(block_b, B), 8)
    if B > 8 and pl.cdiv(B, TB) < 2:
        TB = _round_up(pl.cdiv(B, 2), 8)
    grid = (pl.cdiv(B, TB),)   # ragged last block handled by Pallas masking

    w1, b1 = prepared["w1"], prepared["b1"]
    w2, b2 = prepared["w2"], prepared["b2"]
    w3, b3 = prepared["w3"], prepared["b3"]
    w4, b4 = prepared["w4"], prepared["b4"]

    h1, h2, h3 = w1.shape[1], w2.shape[1], w3.shape[1]
    flops = 2 * B * (in_dim * h1 + h1 * h2 + h2 * h3 + h3 * out_dim)
    param_bytes = sum(int(a.size) * a.dtype.itemsize
                      for a in (w1, b1, w2, b2, w3, b3, w4, b4))
    bytes_accessed = (B * in_dim * x.dtype.itemsize   # activations read
                      + B * out_dim * 4               # f32 output write (true width)
                      + param_bytes)

    out = pl.pallas_call(
        dqn_kernel,
        out_shape=jax.ShapeDtypeStruct((B, out_dim), jnp.float32),
        grid=grid,
        in_specs=[
            pl.BlockSpec((TB, in_dim), lambda i: (i, 0)),
            _resident(w1), _resident(b1),
            _resident(w2), _resident(b2),
            _resident(w3), _resident(b3),
            _resident(w4), _resident(b4),
        ],
        out_specs=pl.BlockSpec((TB, out_dim), lambda i: (i, 0)),
        compiler_params=pltpu.CompilerParams(
            dimension_semantics=("parallel",),
            vmem_limit_bytes=48 * 1024 * 1024),
        cost_estimate=pl.CostEstimate(flops=flops, transcendentals=0,
                                      bytes_accessed=bytes_accessed),
    )(x, w1, b1, w2, b2, w3, b3, w4, b4)
    return out


def make_params(key, input_dim=20, output_dim=8):
    """Deterministic synthetic parameters matching the PyTorch module's shapes."""
    dims = [(input_dim, 256), (256, 128), (128, 64), (64, output_dim)]
    keys = jax.random.split(key, 16)
    p = {}
    for i, (din, dout) in enumerate(dims, start=1):
        bound = 1.0 / (din ** 0.5)  # PyTorch Linear default init range
        p[f"w{i}"] = jax.random.uniform(keys[2 * i - 2], (din, dout),
                                        jnp.float32, -bound, bound)
        p[f"b{i}"] = jax.random.uniform(keys[2 * i - 1], (1, dout),
                                        jnp.float32, -bound, bound)

    # BatchNorm1d (eval) parameters, expressed as per-feature scale/shift.
    eps = 1e-5
    for i, feat in [(1, 256), (2, 128)]:
        kidx = 8 + 4 * (i - 1)
        gamma = 1.0 + 0.1 * jax.random.normal(keys[kidx], (1, feat), jnp.float32)
        beta = 0.1 * jax.random.normal(keys[kidx + 1], (1, feat), jnp.float32)
        running_mean = 0.05 * jax.random.normal(keys[kidx + 2], (1, feat), jnp.float32)
        running_var = jnp.abs(1.0 + 0.1 * jax.random.normal(keys[kidx + 3],
                                                            (1, feat), jnp.float32))
        scale = gamma * jax.lax.rsqrt(running_var + eps)
        shift = beta - running_mean * scale
        p[f"s{i}"] = scale
        p[f"t{i}"] = shift
    return p


def dqn_reference(x, p):
    """Plain-JAX reference (un-folded BN affine) for validation."""
    h = x @ p["w1"] + p["b1"]
    h = jnp.maximum(h * p["s1"] + p["t1"], 0.0)
    h = h @ p["w2"] + p["b2"]
    h = jnp.maximum(h * p["s2"] + p["t2"], 0.0)
    h = jnp.maximum(h @ p["w3"] + p["b3"], 0.0)
    return h @ p["w4"] + p["b4"]


if __name__ == "__main__":
    key = jax.random.PRNGKey(0)
    k_params, k_x1, k_x2 = jax.random.split(key, 3)

    input_dim, output_dim = 20, 8
    params = make_params(k_params, input_dim=input_dim, output_dim=output_dim)

    prep_f32 = prepare_params(params, compute_dtype=jnp.float32)
    prep_bf16 = prepare_params(params)  # default: bf16 hidden-layer matmuls

    # --- small batch, single tile, f32 compute ---
    x = jax.random.normal(k_x1, (4, input_dim), jnp.float32)
    out = jax.block_until_ready(dqn_forward(x, prep_f32))
    ref = dqn_reference(x, params)
    assert out.shape == (4, output_dim)
    assert jnp.allclose(out, ref, atol=1e-4, rtol=1e-4), "f32 mismatch vs reference"

    # --- non-multiple batch exercising the grid (3 tiles of 128, ragged tail) ---
    x2 = jax.random.normal(k_x2, (300, input_dim), jnp.float32)
    out2 = jax.block_until_ready(dqn_forward(x2, prep_f32, block_b=128))
    ref2 = dqn_reference(x2, params)
    assert out2.shape == (300, output_dim)
    assert jnp.allclose(out2, ref2, atol=1e-4, rtol=1e-4), "tiled f32 mismatch"

    # --- default fast path: bf16 hidden matmuls, auto tile split (>= 2 steps) ---
    out_bf16 = jax.block_until_ready(dqn_forward(x2, prep_bf16))
    assert out_bf16.shape == (300, output_dim)
    assert jnp.allclose(out_bf16, ref2, atol=5e-2, rtol=5e-2), "bf16 mismatch"

    print("KERNEL_OK")
</pallas_src>

<mosaic_0001>
module attributes {stable_mosaic.version = 11 : i64} {
  func.func @dqn_kernel(%arg0: i32, %arg1: memref<8x20xf32, #tpu.memory_space<vmem>>, %arg2: memref<20x256xf32, #tpu.memory_space<vmem>>, %arg3: memref<1x256xf32, #tpu.memory_space<vmem>>, %arg4: memref<256x128xf32, #tpu.memory_space<vmem>>, %arg5: memref<1x128xf32, #tpu.memory_space<vmem>>, %arg6: memref<128x64xf32, #tpu.memory_space<vmem>>, %arg7: memref<1x64xf32, #tpu.memory_space<vmem>>, %arg8: memref<64x8xf32, #tpu.memory_space<vmem>>, %arg9: memref<1x8xf32, #tpu.memory_space<vmem>>, %arg10: memref<8x8xf32, #tpu.memory_space<vmem>>) attributes {dimension_semantics = [#tpu.dimension_semantics<parallel>], iteration_bounds = array<i64: 1>, scalar_prefetch = 0 : i64, scratch_operands = 0 : i64, tpu.core_type = #tpu.core_type<tc>, window_params = [{transform_indices = @transform_0, window_bounds = array<i64: 8, 20>}, {pipeline_mode = #tpu.pipeline_mode<synchronous>, transform_indices = @transform_1, window_bounds = array<i64: 20, 256>}, {pipeline_mode = #tpu.pipeline_mode<synchronous>, transform_indices = @transform_2, window_bounds = array<i64: 1, 256>}, {pipeline_mode = #tpu.pipeline_mode<synchronous>, transform_indices = @transform_3, window_bounds = array<i64: 256, 128>}, {pipeline_mode = #tpu.pipeline_mode<synchronous>, transform_indices = @transform_4, window_bounds = array<i64: 1, 128>}, {pipeline_mode = #tpu.pipeline_mode<synchronous>, transform_indices = @transform_5, window_bounds = array<i64: 128, 64>}, {pipeline_mode = #tpu.pipeline_mode<synchronous>, transform_indices = @transform_6, window_bounds = array<i64: 1, 64>}, {pipeline_mode = #tpu.pipeline_mode<synchronous>, transform_indices = @transform_7, window_bounds = array<i64: 64, 8>}, {pipeline_mode = #tpu.pipeline_mode<synchronous>, transform_indices = @transform_8, window_bounds = array<i64: 1, 8>}, {transform_indices = @transform_9, window_bounds = array<i64: 8, 8>}]} {
    %c0 = arith.constant 0 : index
    %c0_0 = arith.constant 0 : index
    %0 = vector.load %arg1[%c0, %c0_0] : memref<8x20xf32, #tpu.memory_space<vmem>>, vector<8x20xf32>
    %c0_1 = arith.constant 0 : index
    %c0_2 = arith.constant 0 : index
    %1 = vector.load %arg2[%c0_1, %c0_2] : memref<20x256xf32, #tpu.memory_space<vmem>>, vector<20x256xf32>
    %cst = arith.constant dense<0.000000e+00> : vector<8x256xf32>
    %2 = tpu.matmul %0, %1, %cst {dimension_numbers = #tpu.dot_dimension_numbers<[1], [0], [0], [1], [0, 0, 1, 1], [], []>} : vector<8x20xf32>, vector<20x256xf32>, vector<8x256xf32> -> vector<8x256xf32>
    %c0_3 = arith.constant 0 : index
    %c0_4 = arith.constant 0 : index
    %3 = vector.load %arg3[%c0_3, %c0_4] : memref<1x256xf32, #tpu.memory_space<vmem>>, vector<1x256xf32>
    %4 = vector.broadcast %3 : vector<1x256xf32> to vector<8x256xf32>
    %5 = arith.addf %2, %4 : vector<8x256xf32>
    %cst_5 = arith.constant 0.000000e+00 : f32
    %6 = vector.broadcast %cst_5 : f32 to vector<8x256xf32>
    %7 = arith.maximumf %5, %6 : vector<8x256xf32>
    %c0_6 = arith.constant 0 : index
    %c0_7 = arith.constant 0 : index
    %8 = vector.load %arg4[%c0_6, %c0_7] : memref<256x128xf32, #tpu.memory_space<vmem>>, vector<256x128xf32>
    %cst_8 = arith.constant dense<0.000000e+00> : vector<8x128xf32>
    %9 = tpu.matmul %7, %8, %cst_8 {dimension_numbers = #tpu.dot_dimension_numbers<[1], [0], [0], [1], [0, 0, 1, 1], [], []>} : vector<8x256xf32>, vector<256x128xf32>, vector<8x128xf32> -> vector<8x128xf32>
    %c0_9 = arith.constant 0 : index
    %c0_10 = arith.constant 0 : index
    %10 = vector.load %arg5[%c0_9, %c0_10] : memref<1x128xf32, #tpu.memory_space<vmem>>, vector<1x128xf32>
    %11 = vector.broadcast %10 : vector<1x128xf32> to vector<8x128xf32>
    %12 = arith.addf %9, %11 : vector<8x128xf32>
    %cst_11 = arith.constant 0.000000e+00 : f32
    %13 = vector.broadcast %cst_11 : f32 to vector<8x128xf32>
    %14 = arith.maximumf %12, %13 : vector<8x128xf32>
    %c0_12 = arith.constant 0 : index
    %c0_13 = arith.constant 0 : index
    %15 = vector.load %arg6[%c0_12, %c0_13] : memref<128x64xf32, #tpu.memory_space<vmem>>, vector<128x64xf32>
    %cst_14 = arith.constant dense<0.000000e+00> : vector<8x64xf32>
    %16 = tpu.matmul %14, %15, %cst_14 {dimension_numbers = #tpu.dot_dimension_numbers<[1], [0], [0], [1], [0, 0, 1, 1], [], []>} : vector<8x128xf32>, vector<128x64xf32>, vector<8x64xf32> -> vector<8x64xf32>
    %c0_15 = arith.constant 0 : index
    %c0_16 = arith.constant 0 : index
    %17 = vector.load %arg7[%c0_15, %c0_16] : memref<1x64xf32, #tpu.memory_space<vmem>>, vector<1x64xf32>
    %18 = vector.broadcast %17 : vector<1x64xf32> to vector<8x64xf32>
    %19 = arith.addf %16, %18 : vector<8x64xf32>
    %cst_17 = arith.constant 0.000000e+00 : f32
    %20 = vector.broadcast %cst_17 : f32 to vector<8x64xf32>
    %21 = arith.maximumf %19, %20 : vector<8x64xf32>
    %c0_18 = arith.constant 0 : index
    %c0_19 = arith.constant 0 : index
    %22 = vector.load %arg8[%c0_18, %c0_19] : memref<64x8xf32, #tpu.memory_space<vmem>>, vector<64x8xf32>
    %cst_20 = arith.constant dense<0.000000e+00> : vector<8x8xf32>
    %23 = tpu.matmul %21, %22, %cst_20 {dimension_numbers = #tpu.dot_dimension_numbers<[1], [0], [0], [1], [0, 0, 1, 1], [], []>} : vector<8x64xf32>, vector<64x8xf32>, vector<8x8xf32> -> vector<8x8xf32>
    %c0_21 = arith.constant 0 : index
    %c0_22 = arith.constant 0 : index
    %24 = vector.load %arg9[%c0_21, %c0_22] : memref<1x8xf32, #tpu.memory_space<vmem>>, vector<1x8xf32>
    %25 = vector.broadcast %24 : vector<1x8xf32> to vector<8x8xf32>
    %26 = arith.addf %23, %25 : vector<8x8xf32>
    %c0_23 = arith.constant 0 : index
    %c0_24 = arith.constant 0 : index
    %27 = vector.load %arg10[%c0_23, %c0_24] : memref<8x8xf32, #tpu.memory_space<vmem>>, vector<8x8xf32>
    tpu.vector_store %arg10[%c0_23, %c0_24], %26 {strides = array<i32>} : memref<8x8xf32, #tpu.memory_space<vmem>>, vector<8x8xf32>,
    return
  }
  func.func @transform_0(%arg0: i32) -> (i32, i32) {
    %c0_i32 = arith.constant 0 : i32
    %c0_i32_0 = arith.constant 0 : i32
    return %arg0, %c0_i32 : i32, i32
  }
  func.func @transform_1(%arg0: i32) -> (i32, i32) {
    %c0_i32 = arith.constant 0 : i32
    %c0_i32_0 = arith.constant 0 : i32
    %c0_i32_1 = arith.constant 0 : i32
    return %c0_i32, %c0_i32_0 : i32, i32
  }
  func.func @transform_2(%arg0: i32) -> (i32, i32) {
    %c0_i32 = arith.constant 0 : i32
    %c0_i32_0 = arith.constant 0 : i32
    %c0_i32_1 = arith.constant 0 : i32
    return %c0_i32, %c0_i32_0 : i32, i32
  }
  func.func @transform_3(%arg0: i32) -> (i32, i32) {
    %c0_i32 = arith.constant 0 : i32
    %c0_i32_0 = arith.constant 0 : i32
    %c0_i32_1 = arith.constant 0 : i32
    return %c0_i32, %c0_i32_0 : i32, i32
  }
  func.func @transform_4(%arg0: i32) -> (i32, i32) {
    %c0_i32 = arith.constant 0 : i32
    %c0_i32_0 = arith.constant 0 : i32
    %c0_i32_1 = arith.constant 0 : i32
    return %c0_i32, %c0_i32_0 : i32, i32
  }
  func.func @transform_5(%arg0: i32) -> (i32, i32) {
    %c0_i32 = arith.constant 0 : i32
    %c0_i32_0 = arith.constant 0 : i32
    %c0_i32_1 = arith.constant 0 : i32
    return %c0_i32, %c0_i32_0 : i32, i32
  }
  func.func @transform_6(%arg0: i32) -> (i32, i32) {
    %c0_i32 = arith.constant 0 : i32
    %c0_i32_0 = arith.constant 0 : i32
    %c0_i32_1 = arith.constant 0 : i32
    return %c0_i32, %c0_i32_0 : i32, i32
  }
  func.func @transform_7(%arg0: i32) -> (i32, i32) {
    %c0_i32 = arith.constant 0 : i32
    %c0_i32_0 = arith.constant 0 : i32
    %c0_i32_1 = arith.constant 0 : i32
    return %c0_i32, %c0_i32_0 : i32, i32
  }
  func.func @transform_8(%arg0: i32) -> (i32, i32) {
    %c0_i32 = arith.constant 0 : i32
    %c0_i32_0 = arith.constant 0 : i32
    %c0_i32_1 = arith.constant 0 : i32
    return %c0_i32, %c0_i32_0 : i32, i32
  }
  func.func @transform_9(%arg0: i32) -> (i32, i32) {
    %c0_i32 = arith.constant 0 : i32
    %c0_i32_0 = arith.constant 0 : i32
    return %arg0, %c0_i32 : i32, i32
  }
}

</mosaic_0001>

<llo_original>
// kernel: tpu_custom_call.1
$region0: #{tpu_custom_call.1}
  #allocation0 [shape = 'u32[]', space=smem, size = 0x4, offset = 0x4, fixed_abs, tag = 'smem constant byte address 0x4 - core index']
  #allocation1 [shape = 'u32[144,128]{1,0:T(1,128)}', space=vmem, size = 0x12000, scoped, tag = 'internal scratch']
  %s0 = inlined_call_operand.vmem [shape: f32[4,20], index: 0, kind: input, shape index: {}]
  %s1 = inlined_call_operand.hbm [shape: f32[20,256], index: 1, kind: input, shape index: {}]
  %s2 = inlined_call_operand.vmem [shape: f32[1,256], index: 2, kind: input, shape index: {}]
  %s3 = inlined_call_operand.vmem [shape: f32[256,128], index: 3, kind: input, shape index: {}]
  %s4 = inlined_call_operand.vmem [shape: f32[1,128], index: 4, kind: input, shape index: {}]
  %s5 = inlined_call_operand.vmem [shape: f32[128,64], index: 5, kind: input, shape index: {}]
  %s6 = inlined_call_operand.vmem [shape: f32[1,64], index: 6, kind: input, shape index: {}]
  %s7 = inlined_call_operand.vmem [shape: f32[64,8], index: 7, kind: input, shape index: {}]
  %s8 = inlined_call_operand.vmem [shape: f32[1,8], index: 8, kind: input, shape index: {}]
  %s9 = inlined_call_operand.hbm [shape: f32[4,8], index: 9, kind: output, shape index: {}]
  %s10 = sld [smem:[#allocation0]]
  $region50: #{tpu_custom_call.1} parent=0
    _
  %s12 = ssub.s32 1, %s10
  %s13 = scalar_select 0, %s12, %s10
  $region1: #{tpu_custom_call.1} parent=0
    #allocation2 [shape = 'u8[24576]{0}', space=vmem, size = 0x6000, scoped, tag = 'input window, operand 1, single buffered']
    #allocation3 [shape = 's32[1]{0}', space=sflag, size = 0x4, scoped, tag = 'scoped memory for tpu_custom_call.1']
    #allocation4 [shape = 's32[1]{0}', space=sflag, size = 0x4, scoped, tag = 'scoped memory for tpu_custom_call.1']
    #allocation5 [shape = 'u8[4096]{0}', space=vmem, size = 0x1000, scoped, tag = 'output window, operand 0, single buffered']
    %14 = vsyncpa [#allocation3], 0
    %15 = vsyncpa [#allocation4], 0
    // Predicated region
    $region2: #{tpu_custom_call.1} parent=1 // pred_check
      _
    $region3: #{tpu_custom_call.1} parent=1 // pred_check_branch
      %17 = sbr.rel (0) target = $region5
    $region4: #{tpu_custom_call.1} parent=1 // pred_region
      _
    $region5: #{tpu_custom_call.1} parent=1 // pred_fallthru
      _
    // Predicated region
    $region6: #{tpu_custom_call.1} parent=1 // pred_check
      _
    $region7: #{tpu_custom_call.1} parent=1 // pred_check_branch
      %19 = sbr.rel (0) target = $region9
    $region8: #{tpu_custom_call.1} parent=1 // pred_region
      %s21 = ssub.s32 768, 768
      %22 = vsyncadd [#allocation3], %s21
      %s23 = sshll.u32 [#allocation2], 4
      %s24 = int_to_ptr.vmem [resolvable:$true] %s23
      %29 = dma.hbm_to_vmem [thread:$0]  %s1, 768, %s24, [#allocation3], 256, 256, 16
    $region9: #{tpu_custom_call.1} parent=1 // pred_fallthru
      _
    // Predicated region
    $region10: #{tpu_custom_call.1} parent=1 // pred_check
      _
    $region11: #{tpu_custom_call.1} parent=1 // pred_check_branch
      %31 = sbr.rel (0) target = $region13
    $region12: #{tpu_custom_call.1} parent=1 // pred_region
      _
    $region13: #{tpu_custom_call.1} parent=1 // pred_fallthru
      _
    // Predicated region
    $region14: #{tpu_custom_call.1} parent=1 // pred_check
      _
    $region15: #{tpu_custom_call.1} parent=1 // pred_check_branch
      %33 = sbr.rel (0) target = $region17
    $region16: #{tpu_custom_call.1} parent=1 // pred_region
      _
    $region17: #{tpu_custom_call.1} parent=1 // pred_fallthru
      _
    // Predicated region
    $region18: #{tpu_custom_call.1} parent=1 // pred_check
      _
    $region19: #{tpu_custom_call.1} parent=1 // pred_check_branch
      %35 = sbr.rel (0) target = $region21
    $region20: #{tpu_custom_call.1} parent=1 // pred_region
      _
    $region21: #{tpu_custom_call.1} parent=1 // pred_fallthru
      _
    // Predicated region
    $region22: #{tpu_custom_call.1} parent=1 // pred_check
      _
    $region23: #{tpu_custom_call.1} parent=1 // pred_check_branch
      %37 = sbr.rel (0) target = $region25
    $region24: #{tpu_custom_call.1} parent=1 // pred_region
      _
    $region25: #{tpu_custom_call.1} parent=1 // pred_fallthru
      _
    // Predicated region
    $region26: #{tpu_custom_call.1} parent=1 // pred_check
      _
    $region27: #{tpu_custom_call.1} parent=1 // pred_check_branch
      %39 = sbr.rel (0) target = $region29
    $region28: #{tpu_custom_call.1} parent=1 // pred_region
      _
    $region29: #{tpu_custom_call.1} parent=1 // pred_fallthru
      _
    // Predicated region
    $region30: #{tpu_custom_call.1} parent=1 // pred_check
      _
    $region31: #{tpu_custom_call.1} parent=1 // pred_check_branch
      %41 = sbr.rel (0) target = $region33
    $region32: #{tpu_custom_call.1} parent=1 // pred_region
      _
    $region33: #{tpu_custom_call.1} parent=1 // pred_fallthru
      _
    // Predicated region
    $region34: #{tpu_custom_call.1} parent=1 // pred_check
      _
    $region35: #{tpu_custom_call.1} parent=1 // pred_check_branch
      %43 = sbr.rel (0) target = $region37
    $region36: #{tpu_custom_call.1} parent=1 // pred_region
      _
    $region37: #{tpu_custom_call.1} parent=1 // pred_fallthru
      _
    // Predicated region
    $region38: #{tpu_custom_call.1} parent=1 // pred_check
      _
    $region39: #{tpu_custom_call.1} parent=1 // pred_check_branch
      %45 = sbr.rel (0) target = $region41
    $region40: #{tpu_custom_call.1} parent=1 // pred_region
      %46 = dma.done [#allocation3], 768
    $region41: #{tpu_custom_call.1} parent=1 // pred_fallthru
      _
    %v47 = vld [vmem:[%s0] sm:$0xff]
    %v48 = vld [vmem:[#allocation2] sm:$0xff]
    %v49 = vld [vmem:[#allocation2 + $0x8] sm:$0xff]
    %v50 = vld [vmem:[#allocation2 + $0x10] sm:$0xff]
    %v51 = vld [vmem:[#allocation2 + $0x18] sm:$0xff]
    %v52 = vld [vmem:[#allocation2 + $0x20] sm:$0xf]
    %v53 = vld [vmem:[#allocation2 + $0x28] sm:$0xf]
    %v54 = vld [vmem:[%s2] sm:$0x3]
    %v56 = vlaneseq
    %v57 = vshrl.u32 %v56, 7
    %v58 = vsub.s32 0, %v57
    %v59 = vrot.slane %v54, %v58
    %v60 = vlaneseq
    %v61 = vshrl.u32 %v60, 7
    %v62 = vsub.s32 1, %v61
    %v63 = vrot.slane %v54, %v62
    %vm66 = vcmask 162816
    %v68 = vsel %vm66, %v47, 0
    %vm70 = vcmask 1043456
    %v72 = vsel %vm70, %v52, 0
    %v75 = vsel %vm70, %v53, 0
    %77 = vmatprep.subr.mxu0 0.0
    %78 = vmatpush1.msra.mxu0 0.0
    %79 = vmatprep.subr.mxu0 0.0
    %80 = vmatpush1.msra.mxu0 0.0
    %81 = vmatprep.subr.mxu0 0.0
    %82 = vmatpush1.msra.mxu0 0.0
    %83 = vmatprep.subr.mxu0 0.0
    %84 = vmatpush1.msra.mxu0 0.0
    %85 = vmatprep.subr.mxu0 0.0
    %86 = vmatpush1.msra.mxu0 0.0
    %87 = vmatprep.subr.mxu0 0.0
    %88 = vmatpush1.msra.mxu0 0.0
    %89 = vmatprep.subr.mxu0 0.0
    %90 = vmatpush1.msra.mxu0 0.0
    %91 = vmatprep.subr.mxu0 0.0
    %92 = vmatpush1.msra.mxu0 0.0
    %93 = vmatprep.subr.mxu0 0.0
    %94 = vmatpush1.msra.mxu0 0.0
    %95 = vmatprep.subr.mxu0 0.0
    %96 = vmatpush1.msra.mxu0 0.0
    %97 = vmatprep.subr.mxu0 0.0
    %98 = vmatpush1.msra.mxu0 0.0
    %99 = vmatprep.subr.mxu0 0.0
    %100 = vmatpush1.msra.mxu0 0.0
    %101 = vmatprep.subr.mxu0 0.0
    %102 = vmatpush1.msra.mxu0 0.0
    %103 = vmatprep.subr.mxu0 %v75
    %104 = vmatpush1.msra.mxu0 %v72
    %105 = vmatprep.subr.mxu0 %v51
    %106 = vmatpush1.msra.mxu0 %v50
    %107 = vmatprep.subr.mxu0 %v49
    %108 = vmatpush1.msra.mxu0 %v48
    %109 = vmatprep.subr.mxu0 0.0
    %110 = vmatpush2.msra.mxu0 0.0
    %111 = vmatprep.subr.mxu0 0.0
    %112 = vmatpush2.msra.mxu0 0.0
    %113 = vmatprep.subr.mxu0 0.0
    %114 = vmatpush2.msra.mxu0 0.0
    %115 = vmatprep.subr.mxu0 0.0
    %116 = vmatpush2.msra.mxu0 0.0
    %117 = vmatprep.subr.mxu0 0.0
    %118 = vmatpush2.msra.mxu0 0.0
    %119 = vmatprep.subr.mxu0 0.0
    %120 = vmatpush2.msra.mxu0 0.0
    %121 = vmatprep.subr.mxu0 0.0
    %122 = vmatpush2.msra.mxu0 0.0
    %123 = vmatprep.subr.mxu0 0.0
    %124 = vmatpush2.msra.mxu0 0.0
    %125 = vmatprep.subr.mxu0 0.0
    %126 = vmatpush2.msra.mxu0 0.0
    %127 = vmatprep.subr.mxu0 0.0
    %128 = vmatpush2.msra.mxu0 0.0
    %129 = vmatprep.subr.mxu0 0.0
    %130 = vmatpush2.msra.mxu0 0.0
    %131 = vmatprep.subr.mxu0 0.0
    %132 = vmatpush2.msra.mxu0 0.0
    %133 = vmatprep.subr.mxu0 0.0
    %134 = vmatpush2.msra.mxu0 0.0
    %135 = vmatprep.subr.mxu0 0.0
    %136 = vmatpush2.msra.mxu0 0.0
    %137 = vmatprep.subr.mxu0 0.0
    %138 = vmatpush2.msra.mxu0 0.0
    %139 = vmatprep.subr.mxu0 0.0
    %140 = vmatpush2.msra.mxu0 0.0
    %141 = vmatprep.mubr.f32.mxu0 0.0
    %142 = vmatmul.mubr.f32.gmra.mxu0 %v68
    %v143 = vpop.f32.mrf.mxu0
    %v144 = vadd.f32 %v59, %v143
    %v145 = vpop.f32.mrf.mxu0
    %v146 = vadd.f32 %v63, %v145
    %147 = vdwg.mxu0
    %v148 = vmax.f32 %v144, 0.0
    %v149 = vmax.f32 %v146, 0.0
    %v150 = vld [vmem:[%s3] sm:$0xff]
    %v151 = vld [vmem:[%s3 + $0x8] sm:$0xff]
    %v152 = vld [vmem:[%s3 + $0x10] sm:$0xff]
    %v153 = vld [vmem:[%s3 + $0x18] sm:$0xff]
    %v154 = vld [vmem:[%s3 + $0x20] sm:$0xff]
    %v155 = vld [vmem:[%s3 + $0x28] sm:$0xff]
    %v156 = vld [vmem:[%s3 + $0x30] sm:$0xff]
    %v157 = vld [vmem:[%s3 + $0x38] sm:$0xff]
    %v158 = vld [vmem:[%s3 + $0x40] sm:$0xff]
    %v159 = vld [vmem:[%s3 + $0x48] sm:$0xff]
    %v160 = vld [vmem:[%s3 + $0x50] sm:$0xff]
    %v161 = vld [vmem:[%s3 + $0x58] sm:$0xff]
    %v162 = vld [vmem:[%s3 + $0x60] sm:$0xff]
    %v163 = vld [vmem:[%s3 + $0x68] sm:$0xff]
    %v164 = vld [vmem:[%s3 + $0x70] sm:$0xff]
    %v165 = vld [vmem:[%s3 + $0x78] sm:$0xff]
    %v166 = vld [vmem:[%s3 + $0x80] sm:$0xff]
    %v167 = vld [vmem:[%s3 + $0x88] sm:$0xff]
    %v168 = vld [vmem:[%s3 + $0x90] sm:$0xff]
    %v169 = vld [vmem:[%s3 + $0x98] sm:$0xff]
    %v170 = vld [vmem:[%s3 + $0xa0] sm:$0xff]
    %v171 = vld [vmem:[%s3 + $0xa8] sm:$0xff]
    %v172 = vld [vmem:[%s3 + $0xb0] sm:$0xff]
    %v173 = vld [vmem:[%s3 + $0xb8] sm:$0xff]
    %v174 = vld [vmem:[%s3 + $0xc0] sm:$0xff]
    %v175 = vld [vmem:[%s3 + $0xc8] sm:$0xff]
    %v176 = vld [vmem:[%s3 + $0xd0] sm:$0xff]
    %v177 = vld [vmem:[%s3 + $0xd8] sm:$0xff]
    %v178 = vld [vmem:[%s3 + $0xe0] sm:$0xff]
    %v179 = vld [vmem:[%s3 + $0xe8] sm:$0xff]
    %v180 = vld [vmem:[%s3 + $0xf0] sm:$0xff]
    %v181 = vld [vmem:[%s3 + $0xf8] sm:$0xff]
    %v182 = vld [vmem:[%s4] sm:$0x1]
    %v184 = vlaneseq
    %v185 = vshrl.u32 %v184, 7
    %v186 = vsub.s32 0, %v185
    %v187 = vrot.slane %v182, %v186
    %189 = vmatprep.subr.mxu0 0.0
    %190 = vmatpush1.msra.mxu0 %v165
    %191 = vmatprep.subr.mxu0 0.0
    %192 = vmatpush1.msra.mxu0 %v164
    %193 = vmatprep.subr.mxu0 0.0
    %194 = vmatpush1.msra.mxu0 %v163
    %195 = vmatprep.subr.mxu0 0.0
    %196 = vmatpush1.msra.mxu0 %v162
    %197 = vmatprep.subr.mxu0 0.0
    %198 = vmatpush1.msra.mxu0 %v161
    %199 = vmatprep.subr.mxu0 0.0
    %200 = vmatpush1.msra.mxu0 %v160
    %201 = vmatprep.subr.mxu0 0.0
    %202 = vmatpush1.msra.mxu0 %v159
    %203 = vmatprep.subr.mxu0 0.0
    %204 = vmatpush1.msra.mxu0 %v158
    %205 = vmatprep.subr.mxu0 0.0
    %206 = vmatpush1.msra.mxu0 %v157
    %207 = vmatprep.subr.mxu0 0.0
    %208 = vmatpush1.msra.mxu0 %v156
    %209 = vmatprep.subr.mxu0 0.0
    %210 = vmatpush1.msra.mxu0 %v155
    %211 = vmatprep.subr.mxu0 0.0
    %212 = vmatpush1.msra.mxu0 %v154
    %213 = vmatprep.subr.mxu0 0.0
    %214 = vmatpush1.msra.mxu0 %v153
    %215 = vmatprep.subr.mxu0 0.0
    %216 = vmatpush1.msra.mxu0 %v152
    %217 = vmatprep.subr.mxu0 0.0
    %218 = vmatpush1.msra.mxu0 %v151
    %219 = vmatprep.subr.mxu0 0.0
    %220 = vmatpush1.msra.mxu0 %v150
    %221 = vmatprep.subr.mxu0 0.0
    %222 = vmatpush2.msra.mxu0 %v181
    %223 = vmatprep.subr.mxu0 0.0
    %224 = vmatpush2.msra.mxu0 %v180
    %225 = vmatprep.subr.mxu0 0.0
    %226 = vmatpush2.msra.mxu0 %v179
    %227 = vmatprep.subr.mxu0 0.0
    %228 = vmatpush2.msra.mxu0 %v178
    %229 = vmatprep.subr.mxu0 0.0
    %230 = vmatpush2.msra.mxu0 %v177
    %231 = vmatprep.subr.mxu0 0.0
    %232 = vmatpush2.msra.mxu0 %v176
    %233 = vmatprep.subr.mxu0 0.0
    %234 = vmatpush2.msra.mxu0 %v175
    %235 = vmatprep.subr.mxu0 0.0
    %236 = vmatpush2.msra.mxu0 %v174
    %237 = vmatprep.subr.mxu0 0.0
    %238 = vmatpush2.msra.mxu0 %v173
    %239 = vmatprep.subr.mxu0 0.0
    %240 = vmatpush2.msra.mxu0 %v172
    %241 = vmatprep.subr.mxu0 0.0
    %242 = vmatpush2.msra.mxu0 %v171
    %243 = vmatprep.subr.mxu0 0.0
    %244 = vmatpush2.msra.mxu0 %v170
    %245 = vmatprep.subr.mxu0 0.0
    %246 = vmatpush2.msra.mxu0 %v169
    %247 = vmatprep.subr.mxu0 0.0
    %248 = vmatpush2.msra.mxu0 %v168
    %249 = vmatprep.subr.mxu0 0.0
    %250 = vmatpush2.msra.mxu0 %v167
    %251 = vmatprep.subr.mxu0 0.0
    %252 = vmatpush2.msra.mxu0 %v166
    %253 = vmatprep.mubr.f32.mxu0 %v149
    %254 = vmatmul.mubr.f32.gmra.mxu0 %v148
    %v255 = vpop.f32.mrf.mxu0
    %v256 = vadd.f32 %v187, %v255
    %v257 = vpop.f32.mrf.mxu0
    %258 = vdwg.mxu0
    %v259 = vmax.f32 %v256, 0.0
    %v260 = vld [vmem:[%s5] sm:$0xff]
    %v261 = vld [vmem:[%s5 + $0x8] sm:$0xff]
    %v262 = vld [vmem:[%s5 + $0x10] sm:$0xff]
    %v263 = vld [vmem:[%s5 + $0x18] sm:$0xff]
    %v264 = vld [vmem:[%s5 + $0x20] sm:$0xff]
    %v265 = vld [vmem:[%s5 + $0x28] sm:$0xff]
    %v266 = vld [vmem:[%s5 + $0x30] sm:$0xff]
    %v267 = vld [vmem:[%s5 + $0x38] sm:$0xff]
    %v268 = vld [vmem:[%s5 + $0x40] sm:$0xff]
    %v269 = vld [vmem:[%s5 + $0x48] sm:$0xff]
    %v270 = vld [vmem:[%s5 + $0x50] sm:$0xff]
    %v271 = vld [vmem:[%s5 + $0x58] sm:$0xff]
    %v272 = vld [vmem:[%s5 + $0x60] sm:$0xff]
    %v273 = vld [vmem:[%s5 + $0x68] sm:$0xff]
    %v274 = vld [vmem:[%s5 + $0x70] sm:$0xff]
    %v275 = vld [vmem:[%s5 + $0x78] sm:$0xff]
    %v276 = vld [vmem:[%s6] sm:$0x1]
    %v278 = vlaneseq
    %v279 = vshrl.u32 %v278, 7
    %v280 = vsub.s32 0, %v279
    %v281 = vrot.slane %v276, %v280
    %283 = vmatprep.subr.mxu0 0.0
    %284 = vmatpush1.msra.mxu0 %v275
    %285 = vmatprep.subr.mxu0 0.0
    %286 = vmatpush1.msra.mxu0 %v274
    %287 = vmatprep.subr.mxu0 0.0
    %288 = vmatpush1.msra.mxu0 %v273
    %289 = vmatprep.subr.mxu0 0.0
    %290 = vmatpush1.msra.mxu0 %v272
    %291 = vmatprep.subr.mxu0 0.0
    %292 = vmatpush1.msra.mxu0 %v271
    %293 = vmatprep.subr.mxu0 0.0
    %294 = vmatpush1.msra.mxu0 %v270
    %295 = vmatprep.subr.mxu0 0.0
    %296 = vmatpush1.msra.mxu0 %v269
    %297 = vmatprep.subr.mxu0 0.0
    %298 = vmatpush1.msra.mxu0 %v268
    %299 = vmatprep.subr.mxu0 0.0
    %300 = vmatpush1.msra.mxu0 %v267
    %301 = vmatprep.subr.mxu0 0.0
    %302 = vmatpush1.msra.mxu0 %v266
    %303 = vmatprep.subr.mxu0 0.0
    %304 = vmatpush1.msra.mxu0 %v265
    %305 = vmatprep.subr.mxu0 0.0
    %306 = vmatpush1.msra.mxu0 %v264
    %307 = vmatprep.subr.mxu0 0.0
    %308 = vmatpush1.msra.mxu0 %v263
    %309 = vmatprep.subr.mxu0 0.0
    %310 = vmatpush1.msra.mxu0 %v262
    %311 = vmatprep.subr.mxu0 0.0
    %312 = vmatpush1.msra.mxu0 %v261
    %313 = vmatprep.subr.mxu0 0.0
    %314 = vmatpush1.msra.mxu0 %v260
    %315 = vmatprep.subr.mxu0 0.0
    %316 = vmatpush2.msra.mxu0 0.0
    %317 = vmatprep.subr.mxu0 0.0
    %318 = vmatpush2.msra.mxu0 0.0
    %319 = vmatprep.subr.mxu0 0.0
    %320 = vmatpush2.msra.mxu0 0.0
    %321 = vmatprep.subr.mxu0 0.0
    %322 = vmatpush2.msra.mxu0 0.0
    %323 = vmatprep.subr.mxu0 0.0
    %324 = vmatpush2.msra.mxu0 0.0
    %325 = vmatprep.subr.mxu0 0.0
    %326 = vmatpush2.msra.mxu0 0.0
    %327 = vmatprep.subr.mxu0 0.0
    %328 = vmatpush2.msra.mxu0 0.0
    %329 = vmatprep.subr.mxu0 0.0
    %330 = vmatpush2.msra.mxu0 0.0
    %331 = vmatprep.subr.mxu0 0.0
    %332 = vmatpush2.msra.mxu0 0.0
    %333 = vmatprep.subr.mxu0 0.0
    %334 = vmatpush2.msra.mxu0 0.0
    %335 = vmatprep.subr.mxu0 0.0
    %336 = vmatpush2.msra.mxu0 0.0
    %337 = vmatprep.subr.mxu0 0.0
    %338 = vmatpush2.msra.mxu0 0.0
    %339 = vmatprep.subr.mxu0 0.0
    %340 = vmatpush2.msra.mxu0 0.0
    %341 = vmatprep.subr.mxu0 0.0
    %342 = vmatpush2.msra.mxu0 0.0
    %343 = vmatprep.subr.mxu0 0.0
    %344 = vmatpush2.msra.mxu0 0.0
    %345 = vmatprep.subr.mxu0 0.0
    %346 = vmatpush2.msra.mxu0 0.0
    %347 = vmatprep.mubr.f32.mxu0 0.0
    %348 = vmatmul.mubr.f32.gmra.mxu0 %v259
    %v349 = vpop.f32.mrf.mxu0
    %v350 = vadd.f32 %v281, %v349
    %v351 = vpop.f32.mrf.mxu0
    %352 = vdwg.mxu0
    %v353 = vmax.f32 %v350, 0.0
    %v354 = vld [vmem:[%s7] sm:$0xff]
    %v355 = vld [vmem:[%s7 + $0x8] sm:$0xff]
    %v356 = vld [vmem:[%s7 + $0x10] sm:$0xff]
    %v357 = vld [vmem:[%s7 + $0x18] sm:$0xff]
    %v358 = vld [vmem:[%s7 + $0x20] sm:$0xff]
    %v359 = vld [vmem:[%s7 + $0x28] sm:$0xff]
    %v360 = vld [vmem:[%s7 + $0x30] sm:$0xff]
    %v361 = vld [vmem:[%s7 + $0x38] sm:$0xff]
    %v362 = vld [vmem:[%s8] sm:$0x1]
    %v364 = vlaneseq
    %v365 = vshrl.u32 %v364, 7
    %v366 = vsub.s32 0, %v365
    %v367 = vrot.slane %v362, %v366
    %vm369 = vcmask 523264
    %v371 = vsel %vm369, %v353, 0
    %373 = vmatprep.subr.mxu0 0.0
    %374 = vmatpush1.msra.mxu0 0.0
    %375 = vmatprep.subr.mxu0 0.0
    %376 = vmatpush1.msra.mxu0 0.0
    %377 = vmatprep.subr.mxu0 0.0
    %378 = vmatpush1.msra.mxu0 0.0
    %379 = vmatprep.subr.mxu0 0.0
    %380 = vmatpush1.msra.mxu0 0.0
    %381 = vmatprep.subr.mxu0 0.0
    %382 = vmatpush1.msra.mxu0 0.0
    %383 = vmatprep.subr.mxu0 0.0
    %384 = vmatpush1.msra.mxu0 0.0
    %385 = vmatprep.subr.mxu0 0.0
    %386 = vmatpush1.msra.mxu0 0.0
    %387 = vmatprep.subr.mxu0 0.0
    %388 = vmatpush1.msra.mxu0 0.0
    %389 = vmatprep.subr.mxu0 0.0
    %390 = vmatpush1.msra.mxu0 %v361
    %391 = vmatprep.subr.mxu0 0.0
    %392 = vmatpush1.msra.mxu0 %v360
    %393 = vmatprep.subr.mxu0 0.0
    %394 = vmatpush1.msra.mxu0 %v359
    %395 = vmatprep.subr.mxu0 0.0
    %396 = vmatpush1.msra.mxu0 %v358
    %397 = vmatprep.subr.mxu0 0.0
    %398 = vmatpush1.msra.mxu0 %v357
    %399 = vmatprep.subr.mxu0 0.0
    %400 = vmatpush1.msra.mxu0 %v356
    %401 = vmatprep.subr.mxu0 0.0
    %402 = vmatpush1.msra.mxu0 %v355
    %403 = vmatprep.subr.mxu0 0.0
    %404 = vmatpush1.msra.mxu0 %v354
    %405 = vmatprep.subr.mxu0 0.0
    %406 = vmatpush2.msra.mxu0 0.0
    %407 = vmatprep.subr.mxu0 0.0
    %408 = vmatpush2.msra.mxu0 0.0
    %409 = vmatprep.subr.mxu0 0.0
    %410 = vmatpush2.msra.mxu0 0.0
    %411 = vmatprep.subr.mxu0 0.0
    %412 = vmatpush2.msra.mxu0 0.0
    %413 = vmatprep.subr.mxu0 0.0
    %414 = vmatpush2.msra.mxu0 0.0
    %415 = vmatprep.subr.mxu0 0.0
    %416 = vmatpush2.msra.mxu0 0.0
    %417 = vmatprep.subr.mxu0 0.0
    %418 = vmatpush2.msra.mxu0 0.0
    %419 = vmatprep.subr.mxu0 0.0
    %420 = vmatpush2.msra.mxu0 0.0
    %421 = vmatprep.subr.mxu0 0.0
    %422 = vmatpush2.msra.mxu0 0.0
    %423 = vmatprep.subr.mxu0 0.0
    %424 = vmatpush2.msra.mxu0 0.0
    %425 = vmatprep.subr.mxu0 0.0
    %426 = vmatpush2.msra.mxu0 0.0
    %427 = vmatprep.subr.mxu0 0.0
    %428 = vmatpush2.msra.mxu0 0.0
    %429 = vmatprep.subr.mxu0 0.0
    %430 = vmatpush2.msra.mxu0 0.0
    %431 = vmatprep.subr.mxu0 0.0
    %432 = vmatpush2.msra.mxu0 0.0
    %433 = vmatprep.subr.mxu0 0.0
    %434 = vmatpush2.msra.mxu0 0.0
    %435 = vmatprep.subr.mxu0 0.0
    %436 = vmatpush2.msra.mxu0 0.0
    %437 = vmatprep.mubr.f32.mxu0 0.0
    %438 = vmatmul.mubr.f32.gmra.mxu0 %v371
    %v439 = vpop.f32.mrf.mxu0
    %v440 = vadd.f32 %v367, %v439
    %v441 = vpop.f32.mrf.mxu0
    %442 = vdwg.mxu0
    %vm443 = vcmask 64512
    %444 = vst.msk [vmem:[#allocation5] sm:$0xff] %vm443, %v440
    // Predicated region
    $region42: #{tpu_custom_call.1} parent=1 // pred_check
      _
    $region43: #{tpu_custom_call.1} parent=1 // pred_check_branch
      %446 = sbr.rel (0) target = $region45
    $region44: #{tpu_custom_call.1} parent=1 // pred_region
      %s448 = ssub.s32 128, 64
      %449 = vsyncadd [#allocation4], %s448
      %s450 = sshll.u32 [#allocation5], 4
      %s451 = int_to_ptr.vmem [resolvable:$true] %s450
      %456 = dma.vmem_to_hbm [thread:$0]  %s451, 64, %s9, [#allocation4], 64, 64, 4
    $region45: #{tpu_custom_call.1} parent=1 // pred_fallthru
      _
    // Predicated region
    $region46: #{tpu_custom_call.1} parent=1 // pred_check
      _
    $region47: #{tpu_custom_call.1} parent=1 // pred_check_branch
      %458 = sbr.rel (0) target = $region49
    $region48: #{tpu_custom_call.1} parent=1 // pred_region
      %459 = dma.done [#allocation4], 128
    $region49: #{tpu_custom_call.1} parent=1 // pred_fallthru
      _
    %460 = vsyncpa [#allocation3], 1
    %461 = vsyncpa [#allocation4], 1

</llo_original>
